<compile_context>
chip_gen: v5e
topology: v5e:2x2
jax: 0.10.0
libtpu: 0.0.40
codegen_flags: <defaults>
</compile_context>

<pallas_src>
import jax
import jax.numpy as jnp
from jax.experimental import pallas as pl
from jax.experimental.pallas import tpu as pltpu


def _round_up(n, m):
    return ((n + m - 1) // m) * m


def mlp_kernel(x_ref, w1_ref, b1_ref, w2_ref, b2_ref, o_ref):
    # linear1: bf16 operands on the MXU (cast on the VPU, free in an HBM-bound
    # kernel), f32 accumulation, bias + ReLU on the VPU.
    x = x_ref[...].astype(jnp.bfloat16)
    w1 = w1_ref[...].astype(jnp.bfloat16)
    h = jnp.dot(x, w1, preferred_element_type=jnp.float32)
    h = jnp.maximum(h + b1_ref[...], 0.0)            # (tb, 128) + (1, 128) broadcast
    # linear2: cast the activation back to bf16 for the MXU, accumulate f32.
    w2 = w2_ref[...].astype(jnp.bfloat16)
    y = jnp.dot(h.astype(jnp.bfloat16), w2, preferred_element_type=jnp.float32)
    o_ref[...] = (y + b2_ref[...]).astype(o_ref.dtype)


def _pick_batch_tile(B, block_b):
    """Batch tile: multiple of 8 (f32 sublane).  When more than one tile is
    needed, prefer an even tile count so v7x's two TensorCores split evenly."""
    tb = min(block_b, _round_up(B, 8))
    n_tiles = pl.cdiv(B, tb)
    if n_tiles > 1 and n_tiles % 2 == 1:
        cand = _round_up(pl.cdiv(B, n_tiles + 1), 8)
        if cand > 0 and pl.cdiv(B, cand) % 2 == 0:
            tb = cand
    return tb


def neural_net_forward(x, w1, b1, w2, b2, *, block_b=512):
    # block_b: sweepable; 512-1024 reaches ~85% of HBM roofline on v5e/v6e, keep
    # <=512-1024 on v7x (64 MiB per-TC VMEM, weights resident per TC).
    B, d_in = x.shape
    hidden = w1.shape[1]
    d_out = w2.shape[1]

    x_f = x.astype(jnp.float32)
    w1_f = w1.astype(jnp.float32)
    w2_f = w2.astype(jnp.float32)
    b1_f = b1.reshape(1, hidden).astype(jnp.float32)
    b2_f = b2.reshape(1, d_out).astype(jnp.float32)

    tb = _pick_batch_tile(B, block_b)
    grid = (pl.cdiv(B, tb),)

    # Explicit scoped-VMEM budget (v5e default is 16 MiB, v6e/v7x 32 MiB scoped).
    # Weights/biases budgeted double-buffered (worst case if the runtime does not
    # collapse constant-index blocks to a single buffer).
    vmem_bytes = (
        2 * tb * d_in * 4                       # x tile (f32), double-buffered
        + 2 * tb * d_out * 4                    # y tile (f32), double-buffered
        + 2 * (d_in * hidden + hidden * d_out) * 4
        + 2 * (hidden + d_out) * 4
    )
    vmem_limit = int(min(max(2 * vmem_bytes, 16 << 20), 48 << 20))

    flops = 2 * B * (d_in * hidden + hidden * d_out)
    bytes_accessed = (
        x_f.size * 4 + w1_f.size * 4 + b1_f.size * 4
        + w2_f.size * 4 + b2_f.size * 4 + B * d_out * 4
    )

    out = pl.pallas_call(
        mlp_kernel,
        out_shape=jax.ShapeDtypeStruct((B, d_out), jnp.float32),
        grid=grid,
        in_specs=[
            pl.BlockSpec((tb, d_in), lambda i: (i, 0)),       # x: streamed per tile
            pl.BlockSpec((d_in, hidden), lambda i: (0, 0)),   # W1: VMEM-resident
            pl.BlockSpec((1, hidden), lambda i: (0, 0)),      # b1: VMEM-resident
            pl.BlockSpec((hidden, d_out), lambda i: (0, 0)),  # W2: VMEM-resident
            pl.BlockSpec((1, d_out), lambda i: (0, 0)),       # b2: VMEM-resident
        ],
        out_specs=pl.BlockSpec((tb, d_out), lambda i: (i, 0)),
        compiler_params=pltpu.CompilerParams(
            dimension_semantics=("parallel",),   # v7x: shard batch tiles over 2 TCs
            vmem_limit_bytes=vmem_limit,
        ),
        cost_estimate=pl.CostEstimate(
            flops=flops, transcendentals=0, bytes_accessed=bytes_accessed),
    )(x_f, w1_f, b1_f, w2_f, b2_f)

    return out


def init_params(key, d_in, d_out, hidden=128, dtype=jnp.float32):
    # Deterministic init mimicking torch.nn.Linear's uniform(-1/sqrt(fan_in), 1/sqrt(fan_in)).
    k1, k2, k3, k4 = jax.random.split(key, 4)
    bound1 = 1.0 / (d_in ** 0.5)
    bound2 = 1.0 / (hidden ** 0.5)
    w1 = jax.random.uniform(k1, (d_in, hidden), dtype, -bound1, bound1)
    b1 = jax.random.uniform(k2, (1, hidden), dtype, -bound1, bound1)
    w2 = jax.random.uniform(k3, (hidden, d_out), dtype, -bound2, bound2)
    b2 = jax.random.uniform(k4, (1, d_out), dtype, -bound2, bound2)
    return w1, b1, w2, b2


if __name__ == "__main__":
    key = jax.random.PRNGKey(0)
    B, d_in, d_out = 8, 32, 16
    kx, kp = jax.random.split(key)
    x = jax.random.normal(kx, (B, d_in), jnp.float32)
    w1, b1, w2, b2 = init_params(kp, d_in, d_out)

    y = neural_net_forward(x, w1, b1, w2, b2)
    jax.block_until_ready(y)

    # Pure-JAX f32 reference (same math as the PyTorch module).  Tolerance covers
    # the bf16 matmul operands (f32 accumulation) used inside the kernel.
    ref = jnp.maximum(x @ w1 + b1, 0.0) @ w2 + b2
    assert y.shape == (B, d_out)
    assert jnp.allclose(y, ref, atol=5e-2, rtol=5e-2), float(jnp.max(jnp.abs(y - ref)))
    print("KERNEL_OK")
</pallas_src>

<mosaic_0001>
module attributes {stable_mosaic.version = 11 : i64} {
  func.func @mlp_kernel(%arg0: i32, %arg1: memref<8x32xf32, #tpu.memory_space<vmem>>, %arg2: memref<32x128xf32, #tpu.memory_space<vmem>>, %arg3: memref<1x128xf32, #tpu.memory_space<vmem>>, %arg4: memref<128x16xf32, #tpu.memory_space<vmem>>, %arg5: memref<1x16xf32, #tpu.memory_space<vmem>>, %arg6: memref<8x16xf32, #tpu.memory_space<vmem>>) attributes {dimension_semantics = [#tpu.dimension_semantics<parallel>], iteration_bounds = array<i64: 1>, scalar_prefetch = 0 : i64, scratch_operands = 0 : i64, tpu.core_type = #tpu.core_type<tc>, window_params = [{transform_indices = @transform_0, window_bounds = array<i64: 8, 32>}, {pipeline_mode = #tpu.pipeline_mode<synchronous>, transform_indices = @transform_1, window_bounds = array<i64: 32, 128>}, {pipeline_mode = #tpu.pipeline_mode<synchronous>, transform_indices = @transform_2, window_bounds = array<i64: 1, 128>}, {pipeline_mode = #tpu.pipeline_mode<synchronous>, transform_indices = @transform_3, window_bounds = array<i64: 128, 16>}, {pipeline_mode = #tpu.pipeline_mode<synchronous>, transform_indices = @transform_4, window_bounds = array<i64: 1, 16>}, {transform_indices = @transform_5, window_bounds = array<i64: 8, 16>}]} {
    %c0 = arith.constant 0 : index
    %c0_0 = arith.constant 0 : index
    %0 = vector.load %arg1[%c0, %c0_0] : memref<8x32xf32, #tpu.memory_space<vmem>>, vector<8x32xf32>
    %1 = arith.truncf %0 : vector<8x32xf32> to vector<8x32xbf16>
    %c0_1 = arith.constant 0 : index
    %c0_2 = arith.constant 0 : index
    %2 = vector.load %arg2[%c0_1, %c0_2] : memref<32x128xf32, #tpu.memory_space<vmem>>, vector<32x128xf32>
    %3 = arith.truncf %2 : vector<32x128xf32> to vector<32x128xbf16>
    %cst = arith.constant dense<0.000000e+00> : vector<8x128xf32>
    %4 = tpu.matmul %1, %3, %cst {dimension_numbers = #tpu.dot_dimension_numbers<[1], [0], [0], [1], [0, 0, 1, 1], [], []>} : vector<8x32xbf16>, vector<32x128xbf16>, vector<8x128xf32> -> vector<8x128xf32>
    %c0_3 = arith.constant 0 : index
    %c0_4 = arith.constant 0 : index
    %5 = vector.load %arg3[%c0_3, %c0_4] : memref<1x128xf32, #tpu.memory_space<vmem>>, vector<1x128xf32>
    %6 = vector.broadcast %5 : vector<1x128xf32> to vector<8x128xf32>
    %7 = arith.addf %4, %6 : vector<8x128xf32>
    %cst_5 = arith.constant 0.000000e+00 : f32
    %8 = vector.broadcast %cst_5 : f32 to vector<8x128xf32>
    %9 = arith.maximumf %7, %8 : vector<8x128xf32>
    %c0_6 = arith.constant 0 : index
    %c0_7 = arith.constant 0 : index
    %10 = vector.load %arg4[%c0_6, %c0_7] : memref<128x16xf32, #tpu.memory_space<vmem>>, vector<128x16xf32>
    %11 = arith.truncf %10 : vector<128x16xf32> to vector<128x16xbf16>
    %12 = arith.truncf %9 : vector<8x128xf32> to vector<8x128xbf16>
    %cst_8 = arith.constant dense<0.000000e+00> : vector<8x16xf32>
    %13 = tpu.matmul %12, %11, %cst_8 {dimension_numbers = #tpu.dot_dimension_numbers<[1], [0], [0], [1], [0, 0, 1, 1], [], []>} : vector<8x128xbf16>, vector<128x16xbf16>, vector<8x16xf32> -> vector<8x16xf32>
    %c0_9 = arith.constant 0 : index
    %c0_10 = arith.constant 0 : index
    %14 = vector.load %arg5[%c0_9, %c0_10] : memref<1x16xf32, #tpu.memory_space<vmem>>, vector<1x16xf32>
    %15 = vector.broadcast %14 : vector<1x16xf32> to vector<8x16xf32>
    %16 = arith.addf %13, %15 : vector<8x16xf32>
    %c0_11 = arith.constant 0 : index
    %c0_12 = arith.constant 0 : index
    %17 = vector.load %arg6[%c0_11, %c0_12] : memref<8x16xf32, #tpu.memory_space<vmem>>, vector<8x16xf32>
    tpu.vector_store %arg6[%c0_11, %c0_12], %16 {strides = array<i32>} : memref<8x16xf32, #tpu.memory_space<vmem>>, vector<8x16xf32>,
    return
  }
  func.func @transform_0(%arg0: i32) -> (i32, i32) {
    %c0_i32 = arith.constant 0 : i32
    %c0_i32_0 = arith.constant 0 : i32
    return %arg0, %c0_i32 : i32, i32
  }
  func.func @transform_1(%arg0: i32) -> (i32, i32) {
    %c0_i32 = arith.constant 0 : i32
    %c0_i32_0 = arith.constant 0 : i32
    %c0_i32_1 = arith.constant 0 : i32
    return %c0_i32, %c0_i32_0 : i32, i32
  }
  func.func @transform_2(%arg0: i32) -> (i32, i32) {
    %c0_i32 = arith.constant 0 : i32
    %c0_i32_0 = arith.constant 0 : i32
    %c0_i32_1 = arith.constant 0 : i32
    return %c0_i32, %c0_i32_0 : i32, i32
  }
  func.func @transform_3(%arg0: i32) -> (i32, i32) {
    %c0_i32 = arith.constant 0 : i32
    %c0_i32_0 = arith.constant 0 : i32
    %c0_i32_1 = arith.constant 0 : i32
    return %c0_i32, %c0_i32_0 : i32, i32
  }
  func.func @transform_4(%arg0: i32) -> (i32, i32) {
    %c0_i32 = arith.constant 0 : i32
    %c0_i32_0 = arith.constant 0 : i32
    %c0_i32_1 = arith.constant 0 : i32
    return %c0_i32, %c0_i32_0 : i32, i32
  }
  func.func @transform_5(%arg0: i32) -> (i32, i32) {
    %c0_i32 = arith.constant 0 : i32
    %c0_i32_0 = arith.constant 0 : i32
    return %arg0, %c0_i32 : i32, i32
  }
}

</mosaic_0001>

<llo_original>
// kernel: tpu_custom_call.1
$region0: #{tpu_custom_call.1}
  #allocation0 [shape = 'u32[]', space=smem, size = 0x4, offset = 0x4, fixed_abs, tag = 'smem constant byte address 0x4 - core index']
  #allocation1 [shape = 'u32[72,128]{1,0:T(1,128)}', space=vmem, size = 0x9000, scoped, tag = 'internal scratch']
  %s0 = inlined_call_operand.vmem [shape: f32[8,32], index: 0, kind: input, shape index: {}]
  %s1 = inlined_call_operand.vmem [shape: f32[32,128], index: 1, kind: input, shape index: {}]
  %s2 = inlined_call_operand.vmem [shape: f32[1,128], index: 2, kind: input, shape index: {}]
  %s3 = inlined_call_operand.vmem [shape: f32[128,16], index: 3, kind: input, shape index: {}]
  %s4 = inlined_call_operand.vmem [shape: f32[1,16], index: 4, kind: input, shape index: {}]
  %s5 = inlined_call_operand.hbm [shape: f32[8,16], index: 5, kind: output, shape index: {}]
  %s6 = sld [smem:[#allocation0]]
  $region30: #{tpu_custom_call.1} parent=0
    _
  %s8 = ssub.s32 1, %s6
  %s9 = scalar_select 0, %s8, %s6
  $region1: #{tpu_custom_call.1} parent=0
    #allocation2 [shape = 'u8[4096]{0}', space=vmem, size = 0x1000, scoped, tag = 'output window, operand 0, single buffered']
    #allocation3 [shape = 's32[1]{0}', space=sflag, size = 0x4, scoped, tag = 'scoped memory for tpu_custom_call.1']
    %10 = vsyncpa [#allocation3], 0
    // Predicated region
    $region2: #{tpu_custom_call.1} parent=1 // pred_check
      _
    $region3: #{tpu_custom_call.1} parent=1 // pred_check_branch
      %12 = sbr.rel (0) target = $region5
    $region4: #{tpu_custom_call.1} parent=1 // pred_region
      _
    $region5: #{tpu_custom_call.1} parent=1 // pred_fallthru
      _
    // Predicated region
    $region6: #{tpu_custom_call.1} parent=1 // pred_check
      _
    $region7: #{tpu_custom_call.1} parent=1 // pred_check_branch
      %14 = sbr.rel (0) target = $region9
    $region8: #{tpu_custom_call.1} parent=1 // pred_region
      _
    $region9: #{tpu_custom_call.1} parent=1 // pred_fallthru
      _
    // Predicated region
    $region10: #{tpu_custom_call.1} parent=1 // pred_check
      _
    $region11: #{tpu_custom_call.1} parent=1 // pred_check_branch
      %16 = sbr.rel (0) target = $region13
    $region12: #{tpu_custom_call.1} parent=1 // pred_region
      _
    $region13: #{tpu_custom_call.1} parent=1 // pred_fallthru
      _
    // Predicated region
    $region14: #{tpu_custom_call.1} parent=1 // pred_check
      _
    $region15: #{tpu_custom_call.1} parent=1 // pred_check_branch
      %18 = sbr.rel (0) target = $region17
    $region16: #{tpu_custom_call.1} parent=1 // pred_region
      _
    $region17: #{tpu_custom_call.1} parent=1 // pred_fallthru
      _
    // Predicated region
    $region18: #{tpu_custom_call.1} parent=1 // pred_check
      _
    $region19: #{tpu_custom_call.1} parent=1 // pred_check_branch
      %20 = sbr.rel (0) target = $region21
    $region20: #{tpu_custom_call.1} parent=1 // pred_region
      _
    $region21: #{tpu_custom_call.1} parent=1 // pred_fallthru
      _
    %v22 = vld [vmem:[%s0] sm:$0xff]
    %v23 = vpack.c.bf16 %v22, %v22
    %v24 = vld [vmem:[%s1] sm:$0xff]
    %v25 = vld [vmem:[%s1 + $0x8] sm:$0xff]
    %v26 = vld [vmem:[%s1 + $0x10] sm:$0xff]
    %v27 = vld [vmem:[%s1 + $0x18] sm:$0xff]
    %v28 = vpack.c.bf16 %v25, %v24
    %v29 = vpack.c.bf16 %v27, %v26
    %v30 = vld [vmem:[%s2] sm:$0x1]
    %v32 = vperm.slane %v30, 0
    %vm34 = vcmask 261120
    %v36 = vsel %vm34, %v23, 0
    %38 = vmatpush.bf16.msra.mxu0 0
    %39 = vmatpush.bf16.msra.mxu0 0
    %40 = vmatpush.bf16.msra.mxu0 0
    %41 = vmatpush.bf16.msra.mxu0 0
    %42 = vmatpush.bf16.msra.mxu0 0
    %43 = vmatpush.bf16.msra.mxu0 0
    %44 = vmatpush.bf16.msra.mxu0 %v29
    %45 = vmatpush.bf16.msra.mxu0 %v28
    %46 = vmatmul.bf16.gmra.mxu0 %v36
    %v47 = vpop.f32.mrf.mxu0
    %v48 = vadd.f32 %v32, %v47
    %v49 = vpop.f32.mrf.mxu0
    %50 = vdwg.mxu0
    %v51 = vmax.f32 %v48, 0.0
    %v52 = vld [vmem:[%s3] sm:$0xff]
    %v53 = vld [vmem:[%s3 + $0x8] sm:$0xff]
    %v54 = vld [vmem:[%s3 + $0x10] sm:$0xff]
    %v55 = vld [vmem:[%s3 + $0x18] sm:$0xff]
    %v56 = vld [vmem:[%s3 + $0x20] sm:$0xff]
    %v57 = vld [vmem:[%s3 + $0x28] sm:$0xff]
    %v58 = vld [vmem:[%s3 + $0x30] sm:$0xff]
    %v59 = vld [vmem:[%s3 + $0x38] sm:$0xff]
    %v60 = vld [vmem:[%s3 + $0x40] sm:$0xff]
    %v61 = vld [vmem:[%s3 + $0x48] sm:$0xff]
    %v62 = vld [vmem:[%s3 + $0x50] sm:$0xff]
    %v63 = vld [vmem:[%s3 + $0x58] sm:$0xff]
    %v64 = vld [vmem:[%s3 + $0x60] sm:$0xff]
    %v65 = vld [vmem:[%s3 + $0x68] sm:$0xff]
    %v66 = vld [vmem:[%s3 + $0x70] sm:$0xff]
    %v67 = vld [vmem:[%s3 + $0x78] sm:$0xff]
    %v68 = vpack.c.bf16 %v53, %v52
    %v69 = vpack.c.bf16 %v55, %v54
    %v70 = vpack.c.bf16 %v57, %v56
    %v71 = vpack.c.bf16 %v59, %v58
    %v72 = vpack.c.bf16 %v61, %v60
    %v73 = vpack.c.bf16 %v63, %v62
    %v74 = vpack.c.bf16 %v65, %v64
    %v75 = vpack.c.bf16 %v67, %v66
    %v76 = vpack.c.bf16 %v51, %v51
    %v77 = vld [vmem:[%s4] sm:$0x1]
    %v79 = vperm.slane %v77, 0
    %81 = vmatpush.bf16.msra.mxu0 %v75
    %82 = vmatpush.bf16.msra.mxu0 %v74
    %83 = vmatpush.bf16.msra.mxu0 %v73
    %84 = vmatpush.bf16.msra.mxu0 %v72
    %85 = vmatpush.bf16.msra.mxu0 %v71
    %86 = vmatpush.bf16.msra.mxu0 %v70
    %87 = vmatpush.bf16.msra.mxu0 %v69
    %88 = vmatpush.bf16.msra.mxu0 %v68
    %89 = vmatmul.bf16.gmra.mxu0 %v76
    %v90 = vpop.f32.mrf.mxu0
    %v91 = vadd.f32 %v79, %v90
    %v92 = vpop.f32.mrf.mxu0
    %93 = vdwg.mxu0
    %vm94 = vcmask 130048
    %95 = vst.msk [vmem:[#allocation2] sm:$0xff] %vm94, %v91
    // Predicated region
    $region22: #{tpu_custom_call.1} parent=1 // pred_check
      _
    $region23: #{tpu_custom_call.1} parent=1 // pred_check_branch
      %97 = sbr.rel (0) target = $region25
    $region24: #{tpu_custom_call.1} parent=1 // pred_region
      %99 = vsyncadd [#allocation3], 0
      %s101 = sshll.u32 [#allocation2], 4
      %s102 = int_to_ptr.vmem [resolvable:$true] %s101
      %s103 = sshll.u32 %s5, 4
      %s104 = int_to_ptr.hbm [resolvable:$true] %s103
      %106 = dma.vmem_to_hbm [thread:$0]  %s102, 128, %s104, [#allocation3]
    $region25: #{tpu_custom_call.1} parent=1 // pred_fallthru
      _
    // Predicated region
    $region26: #{tpu_custom_call.1} parent=1 // pred_check
      _
    $region27: #{tpu_custom_call.1} parent=1 // pred_check_branch
      %108 = sbr.rel (0) target = $region29
    $region28: #{tpu_custom_call.1} parent=1 // pred_region
      %110 = dma.done [#allocation3], 128
    $region29: #{tpu_custom_call.1} parent=1 // pred_fallthru
      _
    %111 = vsyncpa [#allocation3], 1

</llo_original>
